<compile_context>
chip_gen: v7x
topology: tpu7x:2x2x1
jax: 0.10.0
libtpu: 0.0.40
codegen_flags: <defaults>
</compile_context>

<pallas_src>
import functools

import jax
import jax.numpy as jnp
from jax.experimental import pallas as pl
from jax.experimental.pallas import tpu as pltpu

_LANE = 128     # last-dim (lane) granularity for f32
_SUBLANE = 8    # second-to-last-dim (sublane) granularity for f32


def _round_up(n, m):
    return ((n + m - 1) // m) * m


def _ortho_rot_cell_kernel(d_model, x_ref, h_ref, wih_t_ref, w_both_ref, out_ref):
    """Single-block kernel.  All refs are whole (padded) arrays in VMEM.

    x_ref      : (Bp, Ip)        padded input
    h_ref      : (Bp, Dp)        padded hidden state
    wih_t_ref  : (Ip, Dp)        padded W_ih^T
    w_both_ref : (Dp, 2*Dp)      padded [W_hh | inv(W_hh)]
    out_ref    : (Bp, Dp)        padded output (lane-dense stores)
    """
    x = x_ref[...]
    h = h_ref[...]
    d_pad = h.shape[-1]

    # Input projection (Linear, no bias): x @ W_ih^T -> (Bp, Dp)
    outs = jnp.dot(x, wih_t_ref[...], preferred_element_type=jnp.float32)

    # Fused hidden transforms: one MXU matmul, then clean 128-lane slices.
    h_both = jnp.dot(h, w_both_ref[...], preferred_element_type=jnp.float32)
    h_fwd = h_both[:, :d_pad]       # h @ W_hh        (padded)
    h_inv = h_both[:, d_pad:]       # h @ inv(W_hh)   (padded)

    # Per-row conditions on the *logical* last feature (column d_model-1).
    outs_last = outs[:, d_model - 1:d_model]   # (Bp, 1)
    h_last = h[:, d_model - 1:d_model]         # (Bp, 1)
    not_trig = outs_last >= -1.0
    pos = h_last > 0.0
    neg = h_last < 0.0

    zero = jnp.zeros_like(h_fwd)
    add = jnp.where(
        not_trig,
        jnp.where(pos, h_fwd, jnp.where(neg, h_inv, zero)),
        h,
    )

    out_ref[...] = (outs + add).astype(out_ref.dtype)


def pack_params(w_ih, w_hh, inv):
    """One-time weight prep: transpose W_ih, fuse [W_hh | inv], pad to 128 lanes."""
    d_model, inpt_size = w_ih.shape
    in_pad = _round_up(inpt_size, _LANE)
    d_pad = _round_up(d_model, _LANE)

    wih_t_p = jnp.zeros((in_pad, d_pad), jnp.float32)
    wih_t_p = wih_t_p.at[:inpt_size, :d_model].set(w_ih.T.astype(jnp.float32))

    w_both_p = jnp.zeros((d_pad, 2 * d_pad), jnp.float32)
    w_both_p = w_both_p.at[:d_model, :d_model].set(w_hh.astype(jnp.float32))
    w_both_p = w_both_p.at[:d_model, d_pad:d_pad + d_model].set(inv.astype(jnp.float32))
    return wih_t_p, w_both_p


@functools.partial(jax.jit, static_argnames=("d_model", "inpt_size"))
def toy_ortho_rot_cell(x, h, wih_t_p, w_both_p, *, d_model, inpt_size):
    B = x.shape[0]
    in_pad, d_pad = wih_t_p.shape
    b_pad = _round_up(B, _SUBLANE)

    # Zero-pad activations to lane/sublane-dense shapes (fused by jit).
    x_p = jnp.zeros((b_pad, in_pad), jnp.float32).at[:B, :inpt_size].set(x)
    h_p = jnp.zeros((b_pad, d_pad), jnp.float32).at[:B, :d_model].set(h)

    kernel = functools.partial(_ortho_rot_cell_kernel, d_model)
    out_p = pl.pallas_call(
        kernel,
        out_shape=jax.ShapeDtypeStruct((b_pad, d_pad), jnp.float32),
        in_specs=[pl.BlockSpec(memory_space=pltpu.MemorySpace.VMEM)] * 4,
        out_specs=pl.BlockSpec(memory_space=pltpu.MemorySpace.VMEM),
    )(x_p, h_p, wih_t_p, w_both_p)

    return out_p[:B, :d_model]


def _reference(x, h, w_ih, w_hh, inv):
    outs = x @ w_ih.T
    not_trig = outs[:, -1] >= -1.0
    pos = (h[:, -1] > 0.0) & not_trig
    neg = (h[:, -1] < 0.0) & not_trig
    trig = ~not_trig
    outs = outs + jnp.where(pos[:, None], h @ w_hh, 0.0)
    outs = outs + jnp.where(neg[:, None], h @ inv, 0.0)
    outs = outs + jnp.where(trig[:, None], h, 0.0)
    return outs


def make_params(inpt_size, d_model, key):
    """Deterministic re-implementation of reset_parameters()."""
    # weight_ih = eye(inpt_size)[:d_model]  -> shape (d_model, inpt_size)
    w_ih = jnp.eye(inpt_size, dtype=jnp.float32)[:d_model]
    # init_h_mtx: identity with a random orthogonal (d_model-1)x(d_model-1) block.
    rand = jax.random.normal(key, (d_model - 1, d_model - 1), dtype=jnp.float32)
    orth, _, _ = jnp.linalg.svd(rand)
    w_hh = jnp.eye(d_model, dtype=jnp.float32)
    w_hh = w_hh.at[:-1, :-1].set(orth)
    inv = jnp.linalg.inv(w_hh)
    return w_ih, w_hh, inv


if __name__ == "__main__":
    B, inpt_size, d_model = 8, 32, 32

    key = jax.random.PRNGKey(0)
    k_orth, k_x, k_h = jax.random.split(key, 3)

    w_ih, w_hh, inv = make_params(inpt_size, d_model, k_orth)
    wih_t_p, w_both_p = pack_params(w_ih, w_hh, inv)

    x = jax.random.normal(k_x, (B, inpt_size), dtype=jnp.float32)
    h = jax.random.normal(k_h, (B, d_model), dtype=jnp.float32)

    out = toy_ortho_rot_cell(x, h, wih_t_p, w_both_p,
                             d_model=d_model, inpt_size=inpt_size)
    out = jax.block_until_ready(out)

    ref = _reference(x, h, w_ih, w_hh, inv)
    assert out.shape == (B, d_model)
    assert jnp.allclose(out, ref, atol=1e-5, rtol=1e-5), "mismatch vs reference"

    print("KERNEL_OK")
</pallas_src>

<mosaic_0001>
module attributes {stable_mosaic.version = 11 : i64} {
  func.func @_ortho_rot_cell_kernel(%arg0: memref<8x128xf32, #tpu.memory_space<vmem>>, %arg1: memref<8x128xf32, #tpu.memory_space<vmem>>, %arg2: memref<128x128xf32, #tpu.memory_space<vmem>>, %arg3: memref<128x256xf32, #tpu.memory_space<vmem>>, %arg4: memref<8x128xf32, #tpu.memory_space<vmem>>) attributes {dimension_semantics = [], scalar_prefetch = 0 : i64, scratch_operands = 0 : i64, tpu.core_type = #tpu.core_type<tc>} {
    %c0 = arith.constant 0 : index
    %c0_0 = arith.constant 0 : index
    %0 = vector.load %arg0[%c0, %c0_0] : memref<8x128xf32, #tpu.memory_space<vmem>>, vector<8x128xf32>
    %c0_1 = arith.constant 0 : index
    %c0_2 = arith.constant 0 : index
    %1 = vector.load %arg1[%c0_1, %c0_2] : memref<8x128xf32, #tpu.memory_space<vmem>>, vector<8x128xf32>
    %c0_3 = arith.constant 0 : index
    %c0_4 = arith.constant 0 : index
    %2 = vector.load %arg2[%c0_3, %c0_4] : memref<128x128xf32, #tpu.memory_space<vmem>>, vector<128x128xf32>
    %cst = arith.constant dense<0.000000e+00> : vector<8x128xf32>
    %3 = tpu.matmul %0, %2, %cst {dimension_numbers = #tpu.dot_dimension_numbers<[1], [0], [0], [1], [0, 0, 1, 1], [], []>} : vector<8x128xf32>, vector<128x128xf32>, vector<8x128xf32> -> vector<8x128xf32>
    %c0_5 = arith.constant 0 : index
    %c0_6 = arith.constant 0 : index
    %4 = vector.load %arg3[%c0_5, %c0_6] : memref<128x256xf32, #tpu.memory_space<vmem>>, vector<128x256xf32>
    %cst_7 = arith.constant dense<0.000000e+00> : vector<8x256xf32>
    %5 = tpu.matmul %1, %4, %cst_7 {dimension_numbers = #tpu.dot_dimension_numbers<[1], [0], [0], [1], [0, 0, 1, 1], [], []>} : vector<8x128xf32>, vector<128x256xf32>, vector<8x256xf32> -> vector<8x256xf32>
    %6 = vector.extract_strided_slice %5 {offsets = [0, 0], sizes = [8, 128], strides = [1, 1]} : vector<8x256xf32> to vector<8x128xf32>
    %7 = vector.extract_strided_slice %5 {offsets = [0, 128], sizes = [8, 128], strides = [1, 1]} : vector<8x256xf32> to vector<8x128xf32>
    %8 = vector.extract_strided_slice %3 {offsets = [0, 31], sizes = [8, 1], strides = [1, 1]} : vector<8x128xf32> to vector<8x1xf32>
    %9 = vector.extract_strided_slice %1 {offsets = [0, 31], sizes = [8, 1], strides = [1, 1]} : vector<8x128xf32> to vector<8x1xf32>
    %cst_8 = arith.constant -1.000000e+00 : f32
    %10 = vector.broadcast %cst_8 : f32 to vector<8x1xf32>
    %11 = arith.cmpf oge, %8, %10 : vector<8x1xf32>
    %cst_9 = arith.constant 0.000000e+00 : f32
    %12 = vector.broadcast %cst_9 : f32 to vector<8x1xf32>
    %13 = arith.cmpf ogt, %9, %12 : vector<8x1xf32>
    %cst_10 = arith.constant 0.000000e+00 : f32
    %14 = vector.broadcast %cst_10 : f32 to vector<8x1xf32>
    %15 = arith.cmpf olt, %9, %14 : vector<8x1xf32>
    %cst_11 = arith.constant 0.000000e+00 : f32
    %16 = vector.broadcast %cst_11 : f32 to vector<8x128xf32>
    %17 = vector.shape_cast %15 : vector<8x1xi1> to vector<8x1xi1>
    %18 = vector.broadcast %17 : vector<8x1xi1> to vector<8x128xi1>
    %19 = arith.select %18, %7, %16 : vector<8x128xi1>, vector<8x128xf32>
    %20 = vector.shape_cast %13 : vector<8x1xi1> to vector<8x1xi1>
    %21 = vector.broadcast %20 : vector<8x1xi1> to vector<8x128xi1>
    %22 = arith.select %21, %6, %19 : vector<8x128xi1>, vector<8x128xf32>
    %23 = vector.shape_cast %11 : vector<8x1xi1> to vector<8x1xi1>
    %24 = vector.broadcast %23 : vector<8x1xi1> to vector<8x128xi1>
    %25 = arith.select %24, %22, %1 : vector<8x128xi1>, vector<8x128xf32>
    %26 = arith.addf %3, %25 : vector<8x128xf32>
    %c0_12 = arith.constant 0 : index
    %c0_13 = arith.constant 0 : index
    %27 = vector.load %arg4[%c0_12, %c0_13] : memref<8x128xf32, #tpu.memory_space<vmem>>, vector<8x128xf32>
    tpu.vector_store %arg4[%c0_12, %c0_13], %26 {strides = array<i32>} : memref<8x128xf32, #tpu.memory_space<vmem>>, vector<8x128xf32>,
    return
  }
}

</mosaic_0001>

<llo_original>
// kernel: toy_ortho_rot_cell.1
$region0: #{toy_ortho_rot_cell.1}
  #allocation0 [shape = 'u32[]', space=smem, size = 0x4, offset = 0x4, fixed_abs, tag = 'smem constant byte address 0x4 - core index']
  #allocation1 [shape = 'u32[144,128]{1,0:T(1,128)}', space=vmem, size = 0x12000, scoped, tag = 'internal scratch']
  %s0 = inlined_call_operand.vmem [shape: f32[8,128], index: 0, kind: input, shape index: {}]
  %s1 = inlined_call_operand.vmem [shape: f32[8,128], index: 1, kind: input, shape index: {}]
  %s2 = inlined_call_operand.hbm [shape: f32[128,128], index: 2, kind: input, shape index: {}]
  %s3 = inlined_call_operand.hbm [shape: f32[128,256], index: 3, kind: input, shape index: {}]
  %s4 = inlined_call_operand.hbm [shape: f32[8,128], index: 4, kind: output, shape index: {}]
  %s5 = sld [smem:[#allocation0]]
  $region34: #{toy_ortho_rot_cell.1} parent=0
    _
  %s7 = ssub.s32 1, %s5
  %s8 = scalar_select 0, %s7, %s5
  $region1: #{toy_ortho_rot_cell.1} parent=0
    #allocation2 [shape = 'u8[65536]{0}', space=vmem, size = 0x10000, scoped, tag = 'input window, operand 2, single buffered']
    #allocation3 [shape = 's32[1]{0}', space=sflag, size = 0x4, scoped, tag = 'scoped memory for toy_ortho_rot_cell.1']
    #allocation4 [shape = 's32[1]{0}', space=sflag, size = 0x4, scoped, tag = 'scoped memory for toy_ortho_rot_cell.1']
    #allocation5 [shape = 'u8[131072]{0}', space=vmem, size = 0x20000, scoped, tag = 'input window, operand 3, single buffered']
    #allocation6 [shape = 's32[1]{0}', space=sflag, size = 0x4, scoped, tag = 'scoped memory for toy_ortho_rot_cell.1']
    #allocation7 [shape = 'u8[4096]{0}', space=vmem, size = 0x1000, scoped, tag = 'output window, operand 0, single buffered']
    %9 = vsyncpa [#allocation3], 0
    %10 = vsyncpa [#allocation6], 0
    %11 = vsyncpa [#allocation4], 0
    // Predicated region
    $region2: #{toy_ortho_rot_cell.1} parent=1 // pred_check
      _
    $region3: #{toy_ortho_rot_cell.1} parent=1 // pred_check_branch
      %13 = sbr.rel (0) target = $region5
    $region4: #{toy_ortho_rot_cell.1} parent=1 // pred_region
      _
    $region5: #{toy_ortho_rot_cell.1} parent=1 // pred_fallthru
      _
    // Predicated region
    $region6: #{toy_ortho_rot_cell.1} parent=1 // pred_check
      _
    $region7: #{toy_ortho_rot_cell.1} parent=1 // pred_check_branch
      %15 = sbr.rel (0) target = $region9
    $region8: #{toy_ortho_rot_cell.1} parent=1 // pred_region
      _
    $region9: #{toy_ortho_rot_cell.1} parent=1 // pred_fallthru
      _
    // Predicated region
    $region10: #{toy_ortho_rot_cell.1} parent=1 // pred_check
      _
    $region11: #{toy_ortho_rot_cell.1} parent=1 // pred_check_branch
      %17 = sbr.rel (0) target = $region13
    $region12: #{toy_ortho_rot_cell.1} parent=1 // pred_region
      %s19 = ssub.s32 2048, 2048
      %20 = vsyncadd [#allocation3], %s19
      %s21 = sshll.u32 [#allocation2], 4
      %s22 = int_to_ptr.vmem [resolvable:$true] %s21
      %27 = dma.hbm_to_vmem [thread:$0]  %s2, 2048, %s22, [#allocation3], 128, 128, 8
    $region13: #{toy_ortho_rot_cell.1} parent=1 // pred_fallthru
      _
    // Predicated region
    $region14: #{toy_ortho_rot_cell.1} parent=1 // pred_check
      _
    $region15: #{toy_ortho_rot_cell.1} parent=1 // pred_check_branch
      %29 = sbr.rel (0) target = $region17
    $region16: #{toy_ortho_rot_cell.1} parent=1 // pred_region
      %s31 = ssub.s32 4096, 4096
      %32 = vsyncadd [#allocation6], %s31
      %s33 = sshll.u32 [#allocation5], 4
      %s34 = int_to_ptr.vmem [resolvable:$true] %s33
      %39 = dma.hbm_to_vmem [thread:$0]  %s3, 4096, %s34, [#allocation6], 256, 256, 16
    $region17: #{toy_ortho_rot_cell.1} parent=1 // pred_fallthru
      _
    // Predicated region
    $region18: #{toy_ortho_rot_cell.1} parent=1 // pred_check
      _
    $region19: #{toy_ortho_rot_cell.1} parent=1 // pred_check_branch
      %41 = sbr.rel (0) target = $region21
    $region20: #{toy_ortho_rot_cell.1} parent=1 // pred_region
      %42 = dma.done [#allocation3], 2048
    $region21: #{toy_ortho_rot_cell.1} parent=1 // pred_fallthru
      _
    // Predicated region
    $region22: #{toy_ortho_rot_cell.1} parent=1 // pred_check
      _
    $region23: #{toy_ortho_rot_cell.1} parent=1 // pred_check_branch
      %44 = sbr.rel (0) target = $region25
    $region24: #{toy_ortho_rot_cell.1} parent=1 // pred_region
      %45 = dma.done [#allocation6], 4096
    $region25: #{toy_ortho_rot_cell.1} parent=1 // pred_fallthru
      _
    %v46 = vld [vmem:[%s0] sm:$0xff]
    %v47 = vld [vmem:[%s1] sm:$0xff]
    %v48 = vld [vmem:[#allocation2] sm:$0xff]
    %v49 = vld [vmem:[#allocation2 + $0x8] sm:$0xff]
    %v50 = vld [vmem:[#allocation2 + $0x10] sm:$0xff]
    %v51 = vld [vmem:[#allocation2 + $0x18] sm:$0xff]
    %v52 = vld [vmem:[#allocation2 + $0x20] sm:$0xff]
    %v53 = vld [vmem:[#allocation2 + $0x28] sm:$0xff]
    %v54 = vld [vmem:[#allocation2 + $0x30] sm:$0xff]
    %v55 = vld [vmem:[#allocation2 + $0x38] sm:$0xff]
    %v56 = vld [vmem:[#allocation2 + $0x40] sm:$0xff]
    %v57 = vld [vmem:[#allocation2 + $0x48] sm:$0xff]
    %v58 = vld [vmem:[#allocation2 + $0x50] sm:$0xff]
    %v59 = vld [vmem:[#allocation2 + $0x58] sm:$0xff]
    %v60 = vld [vmem:[#allocation2 + $0x60] sm:$0xff]
    %v61 = vld [vmem:[#allocation2 + $0x68] sm:$0xff]
    %v62 = vld [vmem:[#allocation2 + $0x70] sm:$0xff]
    %v63 = vld [vmem:[#allocation2 + $0x78] sm:$0xff]
    %64 = vmatprep.subr.mxu0 0.0
    %65 = vmatpush1.msra.mxu0 %v48
    %66 = vmatprep.subr.mxu0 0.0
    %67 = vmatpush1.msra.mxu0 %v49
    %68 = vmatprep.subr.mxu0 0.0
    %69 = vmatpush1.msra.mxu0 %v50
    %70 = vmatprep.subr.mxu0 0.0
    %71 = vmatpush1.msra.mxu0 %v51
    %72 = vmatprep.subr.mxu0 0.0
    %73 = vmatpush1.msra.mxu0 %v52
    %74 = vmatprep.subr.mxu0 0.0
    %75 = vmatpush1.msra.mxu0 %v53
    %76 = vmatprep.subr.mxu0 0.0
    %77 = vmatpush1.msra.mxu0 %v54
    %78 = vmatprep.subr.mxu0 0.0
    %79 = vmatpush1.msra.mxu0 %v55
    %80 = vmatprep.subr.mxu0 0.0
    %81 = vmatpush1.msra.mxu0 %v56
    %82 = vmatprep.subr.mxu0 0.0
    %83 = vmatpush1.msra.mxu0 %v57
    %84 = vmatprep.subr.mxu0 0.0
    %85 = vmatpush1.msra.mxu0 %v58
    %86 = vmatprep.subr.mxu0 0.0
    %87 = vmatpush1.msra.mxu0 %v59
    %88 = vmatprep.subr.mxu0 0.0
    %89 = vmatpush1.msra.mxu0 %v60
    %90 = vmatprep.subr.mxu0 0.0
    %91 = vmatpush1.msra.mxu0 %v61
    %92 = vmatprep.subr.mxu0 0.0
    %93 = vmatpush1.msra.mxu0 %v62
    %94 = vmatprep.subr.mxu0 0.0
    %95 = vmatpush1.msra.mxu0 %v63
    %96 = vmatprep.subr.mxu0 0.0
    %97 = vmatpush1.msra.mxu0 0.0
    %98 = vmatprep.subr.mxu0 0.0
    %99 = vmatpush1.msra.mxu0 0.0
    %100 = vmatprep.subr.mxu0 0.0
    %101 = vmatpush1.msra.mxu0 0.0
    %102 = vmatprep.subr.mxu0 0.0
    %103 = vmatpush1.msra.mxu0 0.0
    %104 = vmatprep.subr.mxu0 0.0
    %105 = vmatpush1.msra.mxu0 0.0
    %106 = vmatprep.subr.mxu0 0.0
    %107 = vmatpush1.msra.mxu0 0.0
    %108 = vmatprep.subr.mxu0 0.0
    %109 = vmatpush1.msra.mxu0 0.0
    %110 = vmatprep.subr.mxu0 0.0
    %111 = vmatpush1.msra.mxu0 0.0
    %112 = vmatprep.subr.mxu0 0.0
    %113 = vmatpush1.msra.mxu0 0.0
    %114 = vmatprep.subr.mxu0 0.0
    %115 = vmatpush1.msra.mxu0 0.0
    %116 = vmatprep.subr.mxu0 0.0
    %117 = vmatpush1.msra.mxu0 0.0
    %118 = vmatprep.subr.mxu0 0.0
    %119 = vmatpush1.msra.mxu0 0.0
    %120 = vmatprep.subr.mxu0 0.0
    %121 = vmatpush1.msra.mxu0 0.0
    %122 = vmatprep.subr.mxu0 0.0
    %123 = vmatpush1.msra.mxu0 0.0
    %124 = vmatprep.subr.mxu0 0.0
    %125 = vmatpush1.msra.mxu0 0.0
    %126 = vmatprep.subr.mxu0 0.0
    %127 = vmatpush1.msra.mxu0 0.0
    %128 = vmatprep.mubr.f32.mxu0 0.0
    %129 = vmatmul.mubr.f32.gmra.mrb[0].mxu0 %v46
    %v130 = vpop.f32.mrb[0].mxu0
    %v131 = vadd.f32 0.0, %v130
    %v132 = vpop.f32.mrb[0].mxu0
    %133 = vdwg.mxu0
    %v134 = vld [vmem:[#allocation5] sm:$0xff]
    %v135 = vld [vmem:[#allocation5 + $0x8] sm:$0xff]
    %v136 = vld [vmem:[#allocation5 + $0x10] sm:$0xff]
    %v137 = vld [vmem:[#allocation5 + $0x18] sm:$0xff]
    %v138 = vld [vmem:[#allocation5 + $0x20] sm:$0xff]
    %v139 = vld [vmem:[#allocation5 + $0x28] sm:$0xff]
    %v140 = vld [vmem:[#allocation5 + $0x30] sm:$0xff]
    %v141 = vld [vmem:[#allocation5 + $0x38] sm:$0xff]
    %v142 = vld [vmem:[#allocation5 + $0x40] sm:$0xff]
    %v143 = vld [vmem:[#allocation5 + $0x48] sm:$0xff]
    %v144 = vld [vmem:[#allocation5 + $0x50] sm:$0xff]
    %v145 = vld [vmem:[#allocation5 + $0x58] sm:$0xff]
    %v146 = vld [vmem:[#allocation5 + $0x60] sm:$0xff]
    %v147 = vld [vmem:[#allocation5 + $0x68] sm:$0xff]
    %v148 = vld [vmem:[#allocation5 + $0x70] sm:$0xff]
    %v149 = vld [vmem:[#allocation5 + $0x78] sm:$0xff]
    %v150 = vld [vmem:[#allocation5 + $0x80] sm:$0xff]
    %v151 = vld [vmem:[#allocation5 + $0x88] sm:$0xff]
    %v152 = vld [vmem:[#allocation5 + $0x90] sm:$0xff]
    %v153 = vld [vmem:[#allocation5 + $0x98] sm:$0xff]
    %v154 = vld [vmem:[#allocation5 + $0xa0] sm:$0xff]
    %v155 = vld [vmem:[#allocation5 + $0xa8] sm:$0xff]
    %v156 = vld [vmem:[#allocation5 + $0xb0] sm:$0xff]
    %v157 = vld [vmem:[#allocation5 + $0xb8] sm:$0xff]
    %v158 = vld [vmem:[#allocation5 + $0xc0] sm:$0xff]
    %v159 = vld [vmem:[#allocation5 + $0xc8] sm:$0xff]
    %v160 = vld [vmem:[#allocation5 + $0xd0] sm:$0xff]
    %v161 = vld [vmem:[#allocation5 + $0xd8] sm:$0xff]
    %v162 = vld [vmem:[#allocation5 + $0xe0] sm:$0xff]
    %v163 = vld [vmem:[#allocation5 + $0xe8] sm:$0xff]
    %v164 = vld [vmem:[#allocation5 + $0xf0] sm:$0xff]
    %v165 = vld [vmem:[#allocation5 + $0xf8] sm:$0xff]
    %166 = vmatprep.subr.mxu0 %v135
    %167 = vmatpush1.msra.mxu0 %v134
    %168 = vmatprep.subr.mxu0 %v137
    %169 = vmatpush1.msra.mxu0 %v136
    %170 = vmatprep.subr.mxu0 %v139
    %171 = vmatpush1.msra.mxu0 %v138
    %172 = vmatprep.subr.mxu0 %v141
    %173 = vmatpush1.msra.mxu0 %v140
    %174 = vmatprep.subr.mxu0 %v143
    %175 = vmatpush1.msra.mxu0 %v142
    %176 = vmatprep.subr.mxu0 %v145
    %177 = vmatpush1.msra.mxu0 %v144
    %178 = vmatprep.subr.mxu0 %v147
    %179 = vmatpush1.msra.mxu0 %v146
    %180 = vmatprep.subr.mxu0 %v149
    %181 = vmatpush1.msra.mxu0 %v148
    %182 = vmatprep.subr.mxu0 %v151
    %183 = vmatpush1.msra.mxu0 %v150
    %184 = vmatprep.subr.mxu0 %v153
    %185 = vmatpush1.msra.mxu0 %v152
    %186 = vmatprep.subr.mxu0 %v155
    %187 = vmatpush1.msra.mxu0 %v154
    %188 = vmatprep.subr.mxu0 %v157
    %189 = vmatpush1.msra.mxu0 %v156
    %190 = vmatprep.subr.mxu0 %v159
    %191 = vmatpush1.msra.mxu0 %v158
    %192 = vmatprep.subr.mxu0 %v161
    %193 = vmatpush1.msra.mxu0 %v160
    %194 = vmatprep.subr.mxu0 %v163
    %195 = vmatpush1.msra.mxu0 %v162
    %196 = vmatprep.subr.mxu0 %v165
    %197 = vmatpush1.msra.mxu0 %v164
    %198 = vmatprep.subr.mxu0 0.0
    %199 = vmatpush1.msra.mxu0 0.0
    %200 = vmatprep.subr.mxu0 0.0
    %201 = vmatpush1.msra.mxu0 0.0
    %202 = vmatprep.subr.mxu0 0.0
    %203 = vmatpush1.msra.mxu0 0.0
    %204 = vmatprep.subr.mxu0 0.0
    %205 = vmatpush1.msra.mxu0 0.0
    %206 = vmatprep.subr.mxu0 0.0
    %207 = vmatpush1.msra.mxu0 0.0
    %208 = vmatprep.subr.mxu0 0.0
    %209 = vmatpush1.msra.mxu0 0.0
    %210 = vmatprep.subr.mxu0 0.0
    %211 = vmatpush1.msra.mxu0 0.0
    %212 = vmatprep.subr.mxu0 0.0
    %213 = vmatpush1.msra.mxu0 0.0
    %214 = vmatprep.subr.mxu0 0.0
    %215 = vmatpush1.msra.mxu0 0.0
    %216 = vmatprep.subr.mxu0 0.0
    %217 = vmatpush1.msra.mxu0 0.0
    %218 = vmatprep.subr.mxu0 0.0
    %219 = vmatpush1.msra.mxu0 0.0
    %220 = vmatprep.subr.mxu0 0.0
    %221 = vmatpush1.msra.mxu0 0.0
    %222 = vmatprep.subr.mxu0 0.0
    %223 = vmatpush1.msra.mxu0 0.0
    %224 = vmatprep.subr.mxu0 0.0
    %225 = vmatpush1.msra.mxu0 0.0
    %226 = vmatprep.subr.mxu0 0.0
    %227 = vmatpush1.msra.mxu0 0.0
    %228 = vmatprep.subr.mxu0 0.0
    %229 = vmatpush1.msra.mxu0 0.0
    %230 = vmatprep.mubr.f32.mxu0 0.0
    %231 = vmatmul.mubr.f32.gmra.mrb[0].mxu0 %v47
    %v232 = vpop.f32.mrb[0].mxu0
    %v233 = vadd.f32 0.0, %v232
    %v234 = vpop.f32.mrb[0].mxu0
    %v235 = vadd.f32 0.0, %v234
    %236 = vdwg.mxu0
    %vm237 = vcmp.ge.f32.partialorder %v131, -1.0
    %vm238 = vcmp.gt.f32.partialorder %v47, 0.0
    %vm239 = vcmp.lt.f32.partialorder %v47, 0.0
    %v240 = vsel %vm239, 1, 0
    %241 = vset.pattern.permute.xlu0 31
    %242 = vperm.xlu0 %241, %v240
    %v243 = vpop.permute.xlu0 %242
    %vm244 = vcmp.eq.s32.totalorder %v243, 1
    %v245 = vsel %vm244, %v235, 0.0
    %v246 = vsel %vm238, 1, 0
    %247 = vset.pattern.permute.xlu0 31
    %248 = vperm.xlu0 %247, %v246
    %v249 = vpop.permute.xlu0 %248
    %vm250 = vcmp.eq.s32.totalorder %v249, 1
    %v251 = vsel %vm250, %v233, %v245
    %v252 = vsel %vm237, 1, 0
    %253 = vset.pattern.permute.xlu0 31
    %254 = vperm.xlu0 %253, %v252
    %v255 = vpop.permute.xlu0 %254
    %vm256 = vcmp.eq.s32.totalorder %v255, 1
    %v257 = vsel %vm256, %v251, %v47
    %v258 = vadd.f32 %v131, %v257
    %259 = vst [vmem:[#allocation7] sm:$0xff] %v258
    // Predicated region
    $region26: #{toy_ortho_rot_cell.1} parent=1 // pred_check
      _
    $region27: #{toy_ortho_rot_cell.1} parent=1 // pred_check_branch
      %261 = sbr.rel (0) target = $region29
    $region28: #{toy_ortho_rot_cell.1} parent=1 // pred_region
      %s263 = ssub.s32 128, 128
      %264 = vsyncadd [#allocation4], %s263
      %s266 = sshll.u32 [#allocation7], 4
      %s267 = int_to_ptr.vmem [resolvable:$true] %s266
      %269 = dma.vmem_to_hbm [thread:$0]  %s267, 128, %s4, [#allocation4]
    $region29: #{toy_ortho_rot_cell.1} parent=1 // pred_fallthru
      _
    // Predicated region
    $region30: #{toy_ortho_rot_cell.1} parent=1 // pred_check
      _
    $region31: #{toy_ortho_rot_cell.1} parent=1 // pred_check_branch
      %271 = sbr.rel (0) target = $region33
    $region32: #{toy_ortho_rot_cell.1} parent=1 // pred_region
      %272 = dma.done [#allocation4], 128
    $region33: #{toy_ortho_rot_cell.1} parent=1 // pred_fallthru
      _
    %273 = vsyncpa [#allocation3], 1
    %274 = vsyncpa [#allocation6], 1
    %275 = vsyncpa [#allocation4], 1

</llo_original>
